<compile_context>
chip_gen: v7x
topology: tpu7x:2x2x1
jax: 0.10.0
libtpu: 0.0.40
codegen_flags: <defaults>
</compile_context>

<pallas_src>
import jax
import jax.numpy as jnp
import numpy as np
from jax.experimental import pallas as pl
from jax.experimental.pallas import tpu as pltpu

SELU_ALPHA = 1.6732632423543772
SELU_SCALE = 1.0507009873554805
BN_EPS = 1e-5


def _make_kernel(N, H, W, Cin, Cout, downsample):
    """Fused residual-block kernel for static shapes (all-VMEM, gridless)."""
    del Cin
    Ho = H + 1                     # conv1 output height: H + 2*1 - 2 + 1
    lanes = W * Cout               # fused (width, channel) lane axis
    inv_cnt = 1.0 / float(N * Ho * W)
    pow2_w = (W & (W - 1)) == 0

    def group_sum(v):
        # v: (1, lanes) f32, lane index = w*Cout + c.  Returns the per-channel
        # sum over w, already broadcast back to every lane.  Pure XLU lane
        # rolls; the roll direction is irrelevant (shift set is symmetric).
        if pow2_w:
            s = Cout
            while s < lanes:
                v = v + pltpu.roll(v, s, axis=1)
                s *= 2
            return v
        acc = v
        for k in range(1, W):      # generic W fallback
            acc = acc + pltpu.roll(v, k * Cout, axis=1)
        return acc

    def body(lhs1_ref, w1_ref, w2_ref, c_ref, ident_ref, out_ref):
        c = c_ref[...]                                   # (8, lanes) f32
        b1, g2, be2, b2 = c[0:1], c[1:2], c[2:3], c[3:4]

        # ---- conv1 (+ fused conv_downsample): one banded bf16 MXU matmul ----
        y = jnp.dot(lhs1_ref[...], w1_ref[...],
                    preferred_element_type=jnp.float32)  # (M, lanes[*2]) f32
        y1 = y[:, :lanes] + b1                           # conv1 + bias

        # ---- bn2: one-pass training-mode batch stats (E[x^2] - mean^2) ------
        col_sum = jnp.sum(y1, axis=0, keepdims=True)     # (1, lanes)
        col_sq = jnp.sum(y1 * y1, axis=0, keepdims=True)
        mean_b = group_sum(col_sum) * inv_cnt            # per-channel, bcast
        ex2_b = group_sum(col_sq) * inv_cnt
        rstd_b = jax.lax.rsqrt(ex2_b - mean_b * mean_b + BN_EPS)
        scale = g2 * rstd_b
        a = y1 * scale + (be2 - mean_b * scale)

        # ---- SELU (kept f32: v5e has no bf16 VPU/EUP) ------------------------
        a = SELU_SCALE * jnp.where(a > 0, a, SELU_ALPHA * (jnp.exp(a) - 1.0))
        ab = a.astype(jnp.bfloat16)

        # ---- conv2 as a K-split over its two kh taps (no lhs2 concat) --------
        z0 = jnp.dot(ab, w2_ref[0:lanes, :], preferred_element_type=jnp.float32)
        z1 = jnp.dot(ab, w2_ref[lanes:2 * lanes, :],
                     preferred_element_type=jnp.float32)
        # conv2 row r needs a[r] (kh=0) and a[r+1] (kh=1).  The wrapped /
        # cross-batch row only lands in the per-batch row that is discarded
        # by the wrapper, so a plain cyclic shift is exact where it matters.
        z1 = jnp.roll(z1, -1, axis=0)
        y2 = z0 + z1 + b2

        # ---- identity branch --------------------------------------------------
        if downsample:
            ident = y[:, lanes:2 * lanes] + c[4:5]       # ds block-cols + bd
        else:
            ident = ident_ref[...]                       # exact f32 x
        out_ref[...] = y2 + ident                        # lane-dense (M, 128)

    if downsample:
        def kernel(lhs1_ref, w1_ref, w2_ref, c_ref, out_ref):
            body(lhs1_ref, w1_ref, w2_ref, c_ref, None, out_ref)
        return kernel
    return body


def _band_selector(W):
    # S[kw, w_in, w_out] = 1 iff w_in == w_out + kw - 1  (width padding = 1;
    # out-of-range taps are simply zero rows of the banded weights).
    kw = np.arange(3)[:, None, None]
    w_in = np.arange(W)[None, :, None]
    w_out = np.arange(W)[None, None, :]
    return (w_in == w_out + kw - 1).astype(np.float32)            # (3, W, W)


def prepare_residual_block_params(params, W):
    """Parameter-only prep (banded weights + packed constants), built ONCE."""
    Cin, Cout = params["w1"].shape[2], params["w1"].shape[3]
    downsample = "wd" in params
    lanes = W * Cout
    S = jnp.asarray(_band_selector(W))                            # (3, W, W)

    w1b = jnp.einsum("xvw,hxio->hviwo", S, params["w1"]).reshape(2 * W * Cin, lanes)
    w2b = jnp.einsum("xvw,hxio->hviwo", S, params["w2"]).reshape(2 * W * Cout, lanes)
    if downsample:
        wdb = jnp.einsum("xvw,xio->viwo", S, params["wd"][0]).reshape(W * Cin, lanes)
        wdb = jnp.concatenate([jnp.zeros_like(wdb), wdb], axis=0)  # kh=1 rows only
        w1b = jnp.concatenate([w1b, wdb], axis=1)                  # fuse conv1 + ds

    # Per-channel params tiled onto the fused (W, Cout) lane axis and packed
    # into a single (8, lanes) f32 operand: rows = b1, g2, be2, b2, bd.
    tile = lambda v: jnp.tile(jnp.reshape(v, (1, Cout)).astype(jnp.float32), (1, W))
    zeros = jnp.zeros((1, lanes), jnp.float32)
    rows = [tile(params["b1"]), tile(params["g2"]), tile(params["be2"]),
            tile(params["b2"]),
            tile(params["bd"]) if downsample else zeros,
            zeros, zeros, zeros]
    consts = jnp.concatenate(rows, axis=0)                         # (8, lanes)

    return {"w1b": w1b.astype(jnp.bfloat16),
            "w2b": w2b.astype(jnp.bfloat16),
            "consts": consts}


@jax.jit
def _forward(x_nchw, prep):
    N, Cin, H, W = x_nchw.shape
    lanes = prep["consts"].shape[1]
    Cout = lanes // W
    downsample = prep["w1b"].shape[1] == 2 * lanes
    Ho = H + 1
    M = N * Ho

    x = jnp.transpose(x_nchw, (0, 2, 3, 1)).astype(jnp.float32)    # NHWC
    xh = jnp.pad(x, ((0, 0), (1, 1), (0, 0), (0, 0)))              # H-pad only

    # conv1 LHS: row (n, ho) = [x_padH row ho | x_padH row ho+1], W*Cin each.
    top = xh[:, 0:Ho].reshape(N, Ho, W * Cin)
    bot = xh[:, 1:Ho + 1].reshape(N, Ho, W * Cin)
    lhs1 = jnp.concatenate([top, bot], axis=-1).reshape(M, 2 * W * Cin)
    lhs1 = lhs1.astype(jnp.bfloat16)

    args = [lhs1, prep["w1b"], prep["w2b"], prep["consts"]]
    if not downsample:
        # Exact f32 residual x on the same (batch, conv1-row) row layout; the
        # extra row per batch is a don't-care and is discarded below.
        ident = jnp.pad(x.reshape(N, H, W * Cin), ((0, 0), (0, 1), (0, 0)))
        args.append(ident.reshape(M, lanes))

    flops = int(2 * M * lhs1.shape[1] * prep["w1b"].shape[1]
                + 2 * 2 * M * lanes * lanes)
    bytes_accessed = int(sum(int(np.prod(a.shape)) * a.dtype.itemsize for a in args)
                         + M * lanes * 4)

    vmem = pl.BlockSpec(memory_space=pltpu.MemorySpace.VMEM)
    out = pl.pallas_call(
        _make_kernel(N, H, W, Cin, Cout, downsample),
        out_shape=jax.ShapeDtypeStruct((M, lanes), jnp.float32),
        in_specs=[vmem] * len(args),
        out_specs=vmem,
        cost_estimate=pl.CostEstimate(flops=flops,
                                      transcendentals=int(M * lanes),
                                      bytes_accessed=bytes_accessed),
    )(*args)

    # Drop the per-batch don't-care row (conv2 output height is H), back to NCHW.
    out = out.reshape(N, Ho, W, Cout)[:, :H]
    return jnp.transpose(out, (0, 3, 1, 2))


def residual_block_forward(x_nchw, prep, first=False):
    """Pallas implementation of Residual_block.forward (NCHW in / NCHW out)."""
    del first  # bn1 + selu are dead code in the reference forward (see notes)
    return _forward(x_nchw, prep)


# ------------------------ pure-JAX reference (NCHW) -------------------------
def _reference_nchw(x, params, quantize_matmul_operands=False):
    """f32 reference; optionally rounds conv operands to bf16 (like the MXU)."""
    dn = ("NCHW", "OIHW", "NCHW")
    r = ((lambda t: t.astype(jnp.bfloat16).astype(jnp.float32))
         if quantize_matmul_operands else (lambda t: t))

    def conv(inp, w_hwio, b, pad):
        w_oihw = jnp.transpose(r(w_hwio), (3, 2, 0, 1))
        y = jax.lax.conv_general_dilated(r(inp), w_oihw, (1, 1), pad,
                                         dimension_numbers=dn,
                                         precision=jax.lax.Precision.HIGHEST)
        return y + b.reshape(1, -1, 1, 1)

    y = conv(x, params["w1"], params["b1"], ((1, 1), (1, 1)))
    mean = jnp.mean(y, axis=(0, 2, 3), keepdims=True)
    var = jnp.mean((y - mean) ** 2, axis=(0, 2, 3), keepdims=True)
    y = (y - mean) / jnp.sqrt(var + BN_EPS)
    y = y * params["g2"].reshape(1, -1, 1, 1) + params["be2"].reshape(1, -1, 1, 1)
    y = jax.nn.selu(y)
    y = conv(y, params["w2"], params["b2"], ((0, 0), (1, 1)))
    if "wd" in params:
        ident = conv(x, params["wd"], params["bd"], ((0, 0), (1, 1)))
    else:
        ident = x
    return y + ident


if __name__ == "__main__":
    key = jax.random.PRNGKey(0)

    def make_params(k, Cin, Cout, downsample):
        ks = jax.random.split(k, 8)
        p = dict(
            w1=0.1 * jax.random.normal(ks[0], (2, 3, Cin, Cout), jnp.float32),
            b1=0.1 * jax.random.normal(ks[1], (1, Cout), jnp.float32),
            g2=1.0 + 0.1 * jax.random.normal(ks[2], (1, Cout), jnp.float32),
            be2=0.1 * jax.random.normal(ks[3], (1, Cout), jnp.float32),
            w2=0.1 * jax.random.normal(ks[4], (2, 3, Cout, Cout), jnp.float32),
            b2=0.1 * jax.random.normal(ks[5], (1, Cout), jnp.float32),
        )
        if downsample:
            p["wd"] = 0.1 * jax.random.normal(ks[6], (1, 3, Cin, Cout), jnp.float32)
            p["bd"] = 0.1 * jax.random.normal(ks[7], (1, Cout), jnp.float32)
        return p

    k1, k2, k3, k4 = jax.random.split(key, 4)

    # case 1: nb_filts = [4, 8]  -> downsample conv on the identity path
    N, Cin, Cout, H, W = 2, 4, 8, 16, 16
    params = make_params(k1, Cin, Cout, True)
    prep = prepare_residual_block_params(params, W)       # built once (review #9)
    x = jax.random.normal(k2, (N, Cin, H, W), jnp.float32)
    out = jax.block_until_ready(residual_block_forward(x, prep))
    assert out.shape == (N, Cout, H, W), out.shape
    # "Tight" check vs a reference whose matmul operands are identically
    # bf16-rounded: remaining slack covers f32 accumulation order and rare
    # one-ulp bf16 rounding flips of the SELU output fed to conv2.
    np.testing.assert_allclose(np.asarray(out),
                               np.asarray(_reference_nchw(x, params, True)),
                               atol=5e-3, rtol=5e-3)
    # Loose check vs the pure-f32 reference (slack = bf16 operand rounding).
    np.testing.assert_allclose(np.asarray(out),
                               np.asarray(_reference_nchw(x, params, False)),
                               atol=5e-2, rtol=5e-2)

    # case 2: nb_filts = [8, 8]  -> plain residual (no downsample conv)
    params2 = make_params(k3, 8, 8, False)
    prep2 = prepare_residual_block_params(params2, W)
    x2 = jax.random.normal(k4, (N, 8, H, W), jnp.float32)
    out2 = jax.block_until_ready(residual_block_forward(x2, prep2, first=True))
    assert out2.shape == (N, 8, H, W), out2.shape
    np.testing.assert_allclose(np.asarray(out2),
                               np.asarray(_reference_nchw(x2, params2, True)),
                               atol=5e-3, rtol=5e-3)
    np.testing.assert_allclose(np.asarray(out2),
                               np.asarray(_reference_nchw(x2, params2, False)),
                               atol=5e-2, rtol=5e-2)

    print("KERNEL_OK")
</pallas_src>

<mosaic_0001>
module attributes {stable_mosaic.version = 11 : i64} {
  func.func @kernel(%arg0: memref<34x128xbf16, #tpu.memory_space<vmem>>, %arg1: memref<128x256xbf16, #tpu.memory_space<vmem>>, %arg2: memref<256x128xbf16, #tpu.memory_space<vmem>>, %arg3: memref<8x128xf32, #tpu.memory_space<vmem>>, %arg4: memref<34x128xf32, #tpu.memory_space<vmem>>) attributes {dimension_semantics = [], scalar_prefetch = 0 : i64, scratch_operands = 0 : i64, tpu.core_type = #tpu.core_type<tc>} {
    %c0 = arith.constant 0 : index
    %c0_0 = arith.constant 0 : index
    %0 = vector.load %arg3[%c0, %c0_0] : memref<8x128xf32, #tpu.memory_space<vmem>>, vector<8x128xf32>
    %1 = vector.extract_strided_slice %0 {offsets = [0, 0], sizes = [1, 128], strides = [1, 1]} : vector<8x128xf32> to vector<1x128xf32>
    %2 = vector.extract_strided_slice %0 {offsets = [1, 0], sizes = [1, 128], strides = [1, 1]} : vector<8x128xf32> to vector<1x128xf32>
    %3 = vector.extract_strided_slice %0 {offsets = [2, 0], sizes = [1, 128], strides = [1, 1]} : vector<8x128xf32> to vector<1x128xf32>
    %4 = vector.extract_strided_slice %0 {offsets = [3, 0], sizes = [1, 128], strides = [1, 1]} : vector<8x128xf32> to vector<1x128xf32>
    %c0_1 = arith.constant 0 : index
    %c0_2 = arith.constant 0 : index
    %5 = vector.load %arg0[%c0_1, %c0_2] : memref<34x128xbf16, #tpu.memory_space<vmem>>, vector<34x128xbf16>
    %c0_3 = arith.constant 0 : index
    %c0_4 = arith.constant 0 : index
    %6 = vector.load %arg1[%c0_3, %c0_4] : memref<128x256xbf16, #tpu.memory_space<vmem>>, vector<128x256xbf16>
    %cst = arith.constant dense<0.000000e+00> : vector<34x256xf32>
    %7 = tpu.matmul %5, %6, %cst {dimension_numbers = #tpu.dot_dimension_numbers<[1], [0], [0], [1], [0, 0, 1, 1], [], []>} : vector<34x128xbf16>, vector<128x256xbf16>, vector<34x256xf32> -> vector<34x256xf32>
    %8 = vector.extract_strided_slice %7 {offsets = [0, 0], sizes = [34, 128], strides = [1, 1]} : vector<34x256xf32> to vector<34x128xf32>
    %9 = vector.broadcast %1 : vector<1x128xf32> to vector<34x128xf32>
    %10 = arith.addf %8, %9 : vector<34x128xf32>
    %cst_5 = arith.constant dense<0.000000e+00> : vector<128xf32>
    %11 = vector.multi_reduction <add>, %10, %cst_5 [0] : vector<34x128xf32> to vector<128xf32>
    %12 = vector.shape_cast %11 : vector<128xf32> to vector<1x128xf32>
    %13 = arith.mulf %10, %10 : vector<34x128xf32>
    %cst_6 = arith.constant dense<0.000000e+00> : vector<128xf32>
    %14 = vector.multi_reduction <add>, %13, %cst_6 [0] : vector<34x128xf32> to vector<128xf32>
    %15 = vector.shape_cast %14 : vector<128xf32> to vector<1x128xf32>
    %c8_i32 = arith.constant 8 : i32
    %16 = tpu.dynamic_rotate %12 by %c8_i32 dim 1 : vector<1x128xf32>, i32 -> vector<1x128xf32>
    %17 = arith.addf %12, %16 : vector<1x128xf32>
    %c16_i32 = arith.constant 16 : i32
    %18 = tpu.dynamic_rotate %17 by %c16_i32 dim 1 : vector<1x128xf32>, i32 -> vector<1x128xf32>
    %19 = arith.addf %17, %18 : vector<1x128xf32>
    %c32_i32 = arith.constant 32 : i32
    %20 = tpu.dynamic_rotate %19 by %c32_i32 dim 1 : vector<1x128xf32>, i32 -> vector<1x128xf32>
    %21 = arith.addf %19, %20 : vector<1x128xf32>
    %c64_i32 = arith.constant 64 : i32
    %22 = tpu.dynamic_rotate %21 by %c64_i32 dim 1 : vector<1x128xf32>, i32 -> vector<1x128xf32>
    %23 = arith.addf %21, %22 : vector<1x128xf32>
    %cst_7 = arith.constant 0.0018382353 : f32
    %24 = vector.broadcast %cst_7 : f32 to vector<1x128xf32>
    %25 = arith.mulf %23, %24 : vector<1x128xf32>
    %c8_i32_8 = arith.constant 8 : i32
    %26 = tpu.dynamic_rotate %15 by %c8_i32_8 dim 1 : vector<1x128xf32>, i32 -> vector<1x128xf32>
    %27 = arith.addf %15, %26 : vector<1x128xf32>
    %c16_i32_9 = arith.constant 16 : i32
    %28 = tpu.dynamic_rotate %27 by %c16_i32_9 dim 1 : vector<1x128xf32>, i32 -> vector<1x128xf32>
    %29 = arith.addf %27, %28 : vector<1x128xf32>
    %c32_i32_10 = arith.constant 32 : i32
    %30 = tpu.dynamic_rotate %29 by %c32_i32_10 dim 1 : vector<1x128xf32>, i32 -> vector<1x128xf32>
    %31 = arith.addf %29, %30 : vector<1x128xf32>
    %c64_i32_11 = arith.constant 64 : i32
    %32 = tpu.dynamic_rotate %31 by %c64_i32_11 dim 1 : vector<1x128xf32>, i32 -> vector<1x128xf32>
    %33 = arith.addf %31, %32 : vector<1x128xf32>
    %cst_12 = arith.constant 0.0018382353 : f32
    %34 = vector.broadcast %cst_12 : f32 to vector<1x128xf32>
    %35 = arith.mulf %33, %34 : vector<1x128xf32>
    %36 = arith.mulf %25, %25 : vector<1x128xf32>
    %37 = arith.subf %35, %36 : vector<1x128xf32>
    %cst_13 = arith.constant 9.99999974E-6 : f32
    %38 = vector.broadcast %cst_13 : f32 to vector<1x128xf32>
    %39 = arith.addf %37, %38 : vector<1x128xf32>
    %40 = math.rsqrt %39 : vector<1x128xf32>
    %41 = arith.mulf %2, %40 : vector<1x128xf32>
    %42 = vector.broadcast %41 : vector<1x128xf32> to vector<34x128xf32>
    %43 = arith.mulf %10, %42 : vector<34x128xf32>
    %44 = arith.mulf %25, %41 : vector<1x128xf32>
    %45 = arith.subf %3, %44 : vector<1x128xf32>
    %46 = vector.broadcast %45 : vector<1x128xf32> to vector<34x128xf32>
    %47 = arith.addf %43, %46 : vector<34x128xf32>
    %cst_14 = arith.constant 0.000000e+00 : f32
    %48 = vector.broadcast %cst_14 : f32 to vector<34x128xf32>
    %49 = arith.cmpf ogt, %47, %48 : vector<34x128xf32>
    %50 = math.exp %47 : vector<34x128xf32>
    %cst_15 = arith.constant 1.000000e+00 : f32
    %51 = vector.broadcast %cst_15 : f32 to vector<34x128xf32>
    %52 = arith.subf %50, %51 : vector<34x128xf32>
    %cst_16 = arith.constant 1.67326319 : f32
    %53 = vector.broadcast %cst_16 : f32 to vector<34x128xf32>
    %54 = arith.mulf %53, %52 : vector<34x128xf32>
    %55 = arith.select %49, %47, %54 : vector<34x128xi1>, vector<34x128xf32>
    %cst_17 = arith.constant 1.05070102 : f32
    %56 = vector.broadcast %cst_17 : f32 to vector<34x128xf32>
    %57 = arith.mulf %56, %55 : vector<34x128xf32>
    %58 = arith.truncf %57 : vector<34x128xf32> to vector<34x128xbf16>
    %c0_18 = arith.constant 0 : index
    %c0_19 = arith.constant 0 : index
    %59 = vector.load %arg2[%c0_18, %c0_19] : memref<256x128xbf16, #tpu.memory_space<vmem>>, vector<128x128xbf16>
    %cst_20 = arith.constant dense<0.000000e+00> : vector<34x128xf32>
    %60 = tpu.matmul %58, %59, %cst_20 {dimension_numbers = #tpu.dot_dimension_numbers<[1], [0], [0], [1], [0, 0, 1, 1], [], []>} : vector<34x128xbf16>, vector<128x128xbf16>, vector<34x128xf32> -> vector<34x128xf32>
    %c128 = arith.constant 128 : index
    %c0_21 = arith.constant 0 : index
    %61 = vector.load %arg2[%c128, %c0_21] : memref<256x128xbf16, #tpu.memory_space<vmem>>, vector<128x128xbf16>
    %cst_22 = arith.constant dense<0.000000e+00> : vector<34x128xf32>
    %62 = tpu.matmul %58, %61, %cst_22 {dimension_numbers = #tpu.dot_dimension_numbers<[1], [0], [0], [1], [0, 0, 1, 1], [], []>} : vector<34x128xbf16>, vector<128x128xbf16>, vector<34x128xf32> -> vector<34x128xf32>
    %63 = vector.extract_strided_slice %62 {offsets = [1, 0], sizes = [33, 128], strides = [1, 1]} : vector<34x128xf32> to vector<33x128xf32>
    %64 = vector.extract_strided_slice %62 {offsets = [0, 0], sizes = [1, 128], strides = [1, 1]} : vector<34x128xf32> to vector<1x128xf32>
    %65 = tpu.concatenate %63, %64 in 0 : vector<33x128xf32>, vector<1x128xf32> -> vector<34x128xf32>
    %66 = arith.addf %60, %65 : vector<34x128xf32>
    %67 = vector.broadcast %4 : vector<1x128xf32> to vector<34x128xf32>
    %68 = arith.addf %66, %67 : vector<34x128xf32>
    %69 = vector.extract_strided_slice %7 {offsets = [0, 128], sizes = [34, 128], strides = [1, 1]} : vector<34x256xf32> to vector<34x128xf32>
    %70 = vector.extract_strided_slice %0 {offsets = [4, 0], sizes = [1, 128], strides = [1, 1]} : vector<8x128xf32> to vector<1x128xf32>
    %71 = vector.broadcast %70 : vector<1x128xf32> to vector<34x128xf32>
    %72 = arith.addf %69, %71 : vector<34x128xf32>
    %73 = arith.addf %68, %72 : vector<34x128xf32>
    %c0_23 = arith.constant 0 : index
    %c0_24 = arith.constant 0 : index
    %74 = vector.load %arg4[%c0_23, %c0_24] : memref<34x128xf32, #tpu.memory_space<vmem>>, vector<34x128xf32>
    tpu.vector_store %arg4[%c0_23, %c0_24], %73 {strides = array<i32>} : memref<34x128xf32, #tpu.memory_space<vmem>>, vector<34x128xf32>,
    return
  }
}

</mosaic_0001>

<llo_original>
// kernel: _forward.1
$region0: #{_forward.1}
  #allocation0 [shape = 'u32[]', space=smem, size = 0x4, offset = 0x4, fixed_abs, tag = 'smem constant byte address 0x4 - core index']
  #allocation1 [shape = 'u32[144,128]{1,0:T(1,128)}', space=vmem, size = 0x12000, scoped, tag = 'internal scratch']
  %s0 = inlined_call_operand.vmem [shape: bf16[34,128], index: 0, kind: input, shape index: {}]
  %s1 = inlined_call_operand.vmem [shape: bf16[128,256], index: 1, kind: input, shape index: {}]
  %s2 = inlined_call_operand.vmem [shape: bf16[256,128], index: 2, kind: input, shape index: {}]
  %s3 = inlined_call_operand.vmem [shape: f32[8,128], index: 3, kind: input, shape index: {}]
  %s4 = inlined_call_operand.vmem [shape: f32[34,128], index: 4, kind: output, shape index: {}]
  %s5 = sld [smem:[#allocation0]]
  $region26: #{_forward.1} parent=0
    _
  %s7 = ssub.s32 1, %s5
  %s8 = scalar_select 0, %s7, %s5
  // Predicated region
  $region2: #{_forward.1} parent=0 // pred_check
    _
  $region3: #{_forward.1} parent=0 // pred_check_branch
    %10 = sbr.rel (0) target = $region5
  $region4: #{_forward.1} parent=0 // pred_region
    _
  $region5: #{_forward.1} parent=0 // pred_fallthru
    _
  // Predicated region
  $region6: #{_forward.1} parent=0 // pred_check
    _
  $region7: #{_forward.1} parent=0 // pred_check_branch
    %12 = sbr.rel (0) target = $region9
  $region8: #{_forward.1} parent=0 // pred_region
    _
  $region9: #{_forward.1} parent=0 // pred_fallthru
    _
  // Predicated region
  $region10: #{_forward.1} parent=0 // pred_check
    _
  $region11: #{_forward.1} parent=0 // pred_check_branch
    %14 = sbr.rel (0) target = $region13
  $region12: #{_forward.1} parent=0 // pred_region
    _
  $region13: #{_forward.1} parent=0 // pred_fallthru
    _
  // Predicated region
  $region14: #{_forward.1} parent=0 // pred_check
    _
  $region15: #{_forward.1} parent=0 // pred_check_branch
    %16 = sbr.rel (0) target = $region17
  $region16: #{_forward.1} parent=0 // pred_region
    _
  $region17: #{_forward.1} parent=0 // pred_fallthru
    _
  %v18 = vld [vmem:[%s3] sm:$0xff]
  %v19 = vld [vmem:[%s0] sm:$0xf]
  %v20 = vld [vmem:[%s0 + $0x4] sm:$0xf]
  %v21 = vld [vmem:[%s0 + $0x8] sm:$0xf]
  %v22 = vld [vmem:[%s0 + $0xc] sm:$0xf]
  %v23 = vld [vmem:[%s0 + $0x10] sm:$0x1]
  %v24 = vld [vmem:[%s1] sm:$0xff]
  %v25 = vld [vmem:[%s1 + $0x8] sm:$0xff]
  %v26 = vld [vmem:[%s1 + $0x10] sm:$0xff]
  %v27 = vld [vmem:[%s1 + $0x18] sm:$0xff]
  %v28 = vld [vmem:[%s1 + $0x20] sm:$0xff]
  %v29 = vld [vmem:[%s1 + $0x28] sm:$0xff]
  %v30 = vld [vmem:[%s1 + $0x30] sm:$0xff]
  %v31 = vld [vmem:[%s1 + $0x38] sm:$0xff]
  %v32 = vld [vmem:[%s1 + $0x40] sm:$0xff]
  %v33 = vld [vmem:[%s1 + $0x48] sm:$0xff]
  %v34 = vld [vmem:[%s1 + $0x50] sm:$0xff]
  %v35 = vld [vmem:[%s1 + $0x58] sm:$0xff]
  %v36 = vld [vmem:[%s1 + $0x60] sm:$0xff]
  %v37 = vld [vmem:[%s1 + $0x68] sm:$0xff]
  %v38 = vld [vmem:[%s1 + $0x70] sm:$0xff]
  %v39 = vld [vmem:[%s1 + $0x78] sm:$0xff]
  %v45 = vunpack.c.l.b16 %v19
  %v46 = vunpack.c.l.b16 %v20
  %v47 = vunpack.c.l.b16 %v21
  %v48 = vunpack.c.l.b16 %v22
  %v49 = vunpack.c.l.b16 %v23
  %v50 = vpack.c.b16 %v46, %v45
  %v51 = vpack.c.b16 %v48, %v47
  %v52 = vpack.c.b16 %v49, %v49
  %v72 = vunpack.c.l.b16 %v24
  %v73 = vunpack.c.h.b16 %v24
  %v74 = vunpack.c.l.b16 %v25
  %v75 = vunpack.c.h.b16 %v25
  %v76 = vunpack.c.l.b16 %v26
  %v77 = vunpack.c.h.b16 %v26
  %v78 = vunpack.c.l.b16 %v27
  %v79 = vunpack.c.h.b16 %v27
  %v80 = vunpack.c.l.b16 %v28
  %v81 = vunpack.c.h.b16 %v28
  %v82 = vunpack.c.l.b16 %v29
  %v83 = vunpack.c.h.b16 %v29
  %v84 = vunpack.c.l.b16 %v30
  %v85 = vunpack.c.h.b16 %v30
  %v86 = vunpack.c.l.b16 %v31
  %v87 = vunpack.c.h.b16 %v31
  %v88 = vunpack.c.l.b16 %v32
  %v89 = vunpack.c.h.b16 %v32
  %v90 = vunpack.c.l.b16 %v33
  %v91 = vunpack.c.h.b16 %v33
  %v92 = vunpack.c.l.b16 %v34
  %v93 = vunpack.c.h.b16 %v34
  %v94 = vunpack.c.l.b16 %v35
  %v95 = vunpack.c.h.b16 %v35
  %v96 = vunpack.c.l.b16 %v36
  %v97 = vunpack.c.h.b16 %v36
  %v98 = vunpack.c.l.b16 %v37
  %v99 = vunpack.c.h.b16 %v37
  %v100 = vunpack.c.l.b16 %v38
  %v101 = vunpack.c.h.b16 %v38
  %v102 = vunpack.c.l.b16 %v39
  %v103 = vunpack.c.h.b16 %v39
  %v104 = vpack.c.b16 %v74, %v72
  %v105 = vpack.c.b16 %v75, %v73
  %v106 = vpack.c.b16 %v78, %v76
  %v107 = vpack.c.b16 %v79, %v77
  %v108 = vpack.c.b16 %v82, %v80
  %v109 = vpack.c.b16 %v83, %v81
  %v110 = vpack.c.b16 %v86, %v84
  %v111 = vpack.c.b16 %v87, %v85
  %v112 = vpack.c.b16 %v90, %v88
  %v113 = vpack.c.b16 %v91, %v89
  %v114 = vpack.c.b16 %v94, %v92
  %v115 = vpack.c.b16 %v95, %v93
  %v116 = vpack.c.b16 %v98, %v96
  %v117 = vpack.c.b16 %v99, %v97
  %v118 = vpack.c.b16 %v102, %v100
  %v119 = vpack.c.b16 %v103, %v101
  %136 = vmatprep.subr.bf16.mxu0 %v105
  %137 = vmatpush1.bf16.msra.mxu0 %v104
  %138 = vmatprep.subr.bf16.mxu0 %v107
  %139 = vmatpush1.bf16.msra.mxu0 %v106
  %140 = vmatprep.subr.bf16.mxu0 %v109
  %141 = vmatpush1.bf16.msra.mxu0 %v108
  %142 = vmatprep.subr.bf16.mxu0 %v111
  %143 = vmatpush1.bf16.msra.mxu0 %v110
  %144 = vmatprep.subr.bf16.mxu0 %v113
  %145 = vmatpush1.bf16.msra.mxu0 %v112
  %146 = vmatprep.subr.bf16.mxu0 %v115
  %147 = vmatpush1.bf16.msra.mxu0 %v114
  %148 = vmatprep.subr.bf16.mxu0 %v117
  %149 = vmatpush1.bf16.msra.mxu0 %v116
  %150 = vmatprep.subr.bf16.mxu0 %v119
  %151 = vmatpush1.bf16.msra.mxu0 %v118
  %152 = vmatprep.subr.bf16.mxu0 0
  %153 = vmatpush1.bf16.msra.mxu0 0
  %154 = vmatprep.subr.bf16.mxu0 0
  %155 = vmatpush1.bf16.msra.mxu0 0
  %156 = vmatprep.subr.bf16.mxu0 0
  %157 = vmatpush1.bf16.msra.mxu0 0
  %158 = vmatprep.subr.bf16.mxu0 0
  %159 = vmatpush1.bf16.msra.mxu0 0
  %160 = vmatprep.subr.bf16.mxu0 0
  %161 = vmatpush1.bf16.msra.mxu0 0
  %162 = vmatprep.subr.bf16.mxu0 0
  %163 = vmatpush1.bf16.msra.mxu0 0
  %164 = vmatprep.subr.bf16.mxu0 0
  %165 = vmatpush1.bf16.msra.mxu0 0
  %166 = vmatprep.subr.bf16.mxu0 0
  %167 = vmatpush1.bf16.msra.mxu0 0
  %168 = vmatprep.mubr.bf16.mxu0 0
  %169 = vmatmul.mubr.bf16.gmra.mrb[0].mxu0 %v50
  %v170 = vpop.f32.mrb[0].mxu0
  %v171 = vadd.f32 0.0, %v170
  %v172 = vpop.f32.mrb[0].mxu0
  %v173 = vadd.f32 0.0, %v172
  %v174 = vpop.f32.mrb[0].mxu0
  %v175 = vadd.f32 0.0, %v174
  %v176 = vpop.f32.mrb[0].mxu0
  %v177 = vadd.f32 0.0, %v176
  %178 = vmatprep.mubr.bf16.mxu0 0
  %179 = vmatmul.mubr.bf16.gmra.mrb[0].mxu0 %v51
  %v180 = vpop.f32.mrb[0].mxu0
  %v181 = vadd.f32 0.0, %v180
  %v182 = vpop.f32.mrb[0].mxu0
  %v183 = vadd.f32 0.0, %v182
  %v184 = vpop.f32.mrb[0].mxu0
  %v185 = vadd.f32 0.0, %v184
  %v186 = vpop.f32.mrb[0].mxu0
  %v187 = vadd.f32 0.0, %v186
  %188 = vmatprep.mubr.bf16.mxu0 0
  %189 = vmatmul.mubr.bf16.gmra.mrb[0].mxu0 %v52
  %v190 = vpop.f32.mrb[0].mxu0
  %v191 = vadd.f32 0.0, %v190
  %v192 = vpop.f32.mrb[0].mxu0
  %v193 = vadd.f32 0.0, %v192
  %v194 = vpop.f32.mrb[0].mxu0
  %v195 = vpop.f32.mrb[0].mxu0
  %196 = vdwg.mxu0
  %v197 = vlaneseq
  %v198 = vshrl.u32 %v197, 7
  %v199 = vsub.s32 0, %v198
  %v200 = vrot.slane %v18, %v199
  %v201 = vadd.f32 %v171, %v200
  %v202 = vadd.f32 %v175, %v200
  %v203 = vadd.f32 %v181, %v200
  %v204 = vadd.f32 %v185, %v200
  %v205 = vadd.f32 %v191, %v200
  %v206 = vadd.f32 %v201, %v202
  %v207 = vadd.f32 %v206, %v203
  %v208 = vadd.f32 %v207, %v204
  %vm209 = vcmask 1041408
  %v210 = vsel %vm209, %v205, 0.0
  %v211 = vadd.f32 %v208, %v210
  %v212 = vrot.slane %v211, 4
  %v213 = vadd.f32 %v211, %v212
  %v214 = vrot.slane %v213, 2
  %v215 = vadd.f32 %v213, %v214
  %v216 = vrot.slane %v215, 1
  %v217 = vadd.f32 %v215, %v216
  %v218 = vmul.f32 %v201, %v201
  %v219 = vmul.f32 %v202, %v202
  %v220 = vmul.f32 %v203, %v203
  %v221 = vmul.f32 %v204, %v204
  %v222 = vmul.f32 %v205, %v205
  %v223 = vadd.f32 %v218, %v219
  %v224 = vadd.f32 %v223, %v220
  %v225 = vadd.f32 %v224, %v221
  %v226 = vsel %vm209, %v222, 0.0
  %v227 = vadd.f32 %v225, %v226
  %v228 = vrot.slane %v227, 4
  %v229 = vadd.f32 %v227, %v228
  %v230 = vrot.slane %v229, 2
  %v231 = vadd.f32 %v229, %v230
  %v232 = vrot.slane %v231, 1
  %v233 = vadd.f32 %v231, %v232
  %234 = vrot.lane.b32.xlu0 %v217, 8
  %v235 = vpop.permute.xlu0 %234
  %v236 = vadd.f32 %v217, %v235
  %237 = vrot.lane.b32.xlu0 %v236, 16
  %v238 = vpop.permute.xlu0 %237
  %v239 = vadd.f32 %v236, %v238
  %240 = vrot.lane.b32.xlu0 %v239, 32
  %v241 = vpop.permute.xlu0 %240
  %v242 = vadd.f32 %v239, %v241
  %243 = vrot.lane.b32.xlu0 %v242, 64
  %v244 = vpop.permute.xlu0 %243
  %v245 = vadd.f32 %v242, %v244
  %v246 = vmul.f32 %v245, 0.0018382353
  %247 = vrot.lane.b32.xlu0 %v233, 8
  %v248 = vpop.permute.xlu0 %247
  %v249 = vadd.f32 %v233, %v248
  %250 = vrot.lane.b32.xlu0 %v249, 16
  %v251 = vpop.permute.xlu0 %250
  %v252 = vadd.f32 %v249, %v251
  %253 = vrot.lane.b32.xlu0 %v252, 32
  %v254 = vpop.permute.xlu0 %253
  %v255 = vadd.f32 %v252, %v254
  %256 = vrot.lane.b32.xlu0 %v255, 64
  %v257 = vpop.permute.xlu0 %256
  %v258 = vadd.f32 %v255, %v257
  %v259 = vmul.f32 %v258, 0.0018382353
  %v260 = vmul.f32 %v246, %v246
  %v261 = vsub.f32 %v259, %v260
  %v262 = vadd.f32 %v261, 1e-05
  %v263 = vrsqrt.pop %v262
  %v265 = vrot.slane %v263, 7
  %v267 = vmul.f32 %v18, %v265
  %v268 = vlaneseq
  %v269 = vshrl.u32 %v268, 7
  %v270 = vsub.s32 1, %v269
  %v271 = vrot.slane %v267, %v270
  %v272 = vmul.f32 %v201, %v271
  %v273 = vmul.f32 %v202, %v271
  %v274 = vmul.f32 %v203, %v271
  %v275 = vmul.f32 %v204, %v271
  %v276 = vmul.f32 %v205, %v271
  %v278 = vrot.slane %v267, 1
  %v280 = vmul.f32 %v246, %v278
  %v282 = vrot.slane %v280, 6
  %v284 = vsub.f32 %v18, %v282
  %v285 = vlaneseq
  %v286 = vshrl.u32 %v285, 7
  %v287 = vsub.s32 2, %v286
  %v288 = vrot.slane %v284, %v287
  %v289 = vadd.f32 %v272, %v288
  %v290 = vadd.f32 %v273, %v288
  %v291 = vadd.f32 %v274, %v288
  %v292 = vadd.f32 %v275, %v288
  %v293 = vadd.f32 %v276, %v288
  %vm294 = vcmp.gt.f32.partialorder %v289, 0.0
  %vm295 = vcmp.gt.f32.partialorder %v290, 0.0
  %vm296 = vcmp.gt.f32.partialorder %v291, 0.0
  %vm297 = vcmp.gt.f32.partialorder %v292, 0.0
  %vm298 = vcmp.gt.f32.partialorder %v293, 0.0
  %v299 = vmul.f32 %v289, 1.442695
  %v300 = vpow.pop %v299
  %v301 = vmul.f32 %v290, 1.442695
  %v302 = vpow.pop %v301
  %v303 = vmul.f32 %v291, 1.442695
  %v304 = vpow.pop %v303
  %v305 = vmul.f32 %v292, 1.442695
  %v306 = vpow.pop %v305
  %v307 = vmul.f32 %v293, 1.442695
  %v308 = vpow.pop %v307
  %v309 = vsub.f32 %v300, 1.0
  %v310 = vsub.f32 %v302, 1.0
  %v311 = vsub.f32 %v304, 1.0
  %v312 = vsub.f32 %v306, 1.0
  %v313 = vsub.f32 %v308, 1.0
  %v314 = vmul.f32 %v309, 1.6732632
  %v315 = vmul.f32 %v310, 1.6732632
  %v316 = vmul.f32 %v311, 1.6732632
  %v317 = vmul.f32 %v312, 1.6732632
  %v318 = vmul.f32 %v313, 1.6732632
  %v319 = vsel %vm294, %v289, %v314
  %v320 = vsel %vm295, %v290, %v315
  %v321 = vsel %vm296, %v291, %v316
  %v322 = vsel %vm297, %v292, %v317
  %v323 = vsel %vm298, %v293, %v318
  %v324 = vmul.f32 %v319, 1.050701
  %v325 = vmul.f32 %v320, 1.050701
  %v326 = vmul.f32 %v321, 1.050701
  %v327 = vmul.f32 %v322, 1.050701
  %v328 = vmul.f32 %v323, 1.050701
  %v329 = vpack.c.bf16 %v325, %v324
  %v330 = vpack.c.bf16 %v327, %v326
  %v331 = vpack.c.bf16 %v328, %v328
  %v332 = vld [vmem:[%s2] sm:$0xf]
  %v333 = vld [vmem:[%s2 + $0x4] sm:$0xf]
  %v334 = vld [vmem:[%s2 + $0x8] sm:$0xf]
  %v335 = vld [vmem:[%s2 + $0xc] sm:$0xf]
  %v336 = vld [vmem:[%s2 + $0x10] sm:$0xf]
  %v337 = vld [vmem:[%s2 + $0x14] sm:$0xf]
  %v338 = vld [vmem:[%s2 + $0x18] sm:$0xf]
  %v339 = vld [vmem:[%s2 + $0x1c] sm:$0xf]
  %v340 = vld [vmem:[%s2 + $0x20] sm:$0xf]
  %v341 = vld [vmem:[%s2 + $0x24] sm:$0xf]
  %v342 = vld [vmem:[%s2 + $0x28] sm:$0xf]
  %v343 = vld [vmem:[%s2 + $0x2c] sm:$0xf]
  %v344 = vld [vmem:[%s2 + $0x30] sm:$0xf]
  %v345 = vld [vmem:[%s2 + $0x34] sm:$0xf]
  %v346 = vld [vmem:[%s2 + $0x38] sm:$0xf]
  %v347 = vld [vmem:[%s2 + $0x3c] sm:$0xf]
  %v348 = vld [vmem:[%s2 + $0x40] sm:$0xf]
  %v349 = vld [vmem:[%s2 + $0x44] sm:$0xf]
  %v350 = vld [vmem:[%s2 + $0x48] sm:$0xf]
  %v351 = vld [vmem:[%s2 + $0x4c] sm:$0xf]
  %v352 = vld [vmem:[%s2 + $0x50] sm:$0xf]
  %v353 = vld [vmem:[%s2 + $0x54] sm:$0xf]
  %v354 = vld [vmem:[%s2 + $0x58] sm:$0xf]
  %v355 = vld [vmem:[%s2 + $0x5c] sm:$0xf]
  %v356 = vld [vmem:[%s2 + $0x60] sm:$0xf]
  %v357 = vld [vmem:[%s2 + $0x64] sm:$0xf]
  %v358 = vld [vmem:[%s2 + $0x68] sm:$0xf]
  %v359 = vld [vmem:[%s2 + $0x6c] sm:$0xf]
  %v360 = vld [vmem:[%s2 + $0x70] sm:$0xf]
  %v361 = vld [vmem:[%s2 + $0x74] sm:$0xf]
  %v362 = vld [vmem:[%s2 + $0x78] sm:$0xf]
  %v363 = vld [vmem:[%s2 + $0x7c] sm:$0xf]
  %v380 = vunpack.c.l.b16 %v348
  %v381 = vunpack.c.l.b16 %v349
  %v382 = vunpack.c.l.b16 %v350
  %v383 = vunpack.c.l.b16 %v351
  %v384 = vunpack.c.l.b16 %v352
  %v385 = vunpack.c.l.b16 %v353
  %v386 = vunpack.c.l.b16 %v354
  %v387 = vunpack.c.l.b16 %v355
  %v388 = vunpack.c.l.b16 %v356
  %v389 = vunpack.c.l.b16 %v357
  %v390 = vunpack.c.l.b16 %v358
  %v391 = vunpack.c.l.b16 %v359
  %v392 = vunpack.c.l.b16 %v360
  %v393 = vunpack.c.l.b16 %v361
  %v394 = vunpack.c.l.b16 %v362
  %v395 = vunpack.c.l.b16 %v363
  %v396 = vpack.c.b16 %v381, %v380
  %v397 = vpack.c.b16 %v383, %v382
  %v398 = vpack.c.b16 %v385, %v384
  %v399 = vpack.c.b16 %v387, %v386
  %v400 = vpack.c.b16 %v389, %v388
  %v401 = vpack.c.b16 %v391, %v390
  %v402 = vpack.c.b16 %v393, %v392
  %v403 = vpack.c.b16 %v395, %v394
  %412 = vmatprep.subr.bf16.mxu0 0
  %413 = vmatpush1.bf16.msra.mxu0 %v396
  %414 = vmatprep.subr.bf16.mxu0 0
  %415 = vmatpush1.bf16.msra.mxu0 %v397
  %416 = vmatprep.subr.bf16.mxu0 0
  %417 = vmatpush1.bf16.msra.mxu0 %v398
  %418 = vmatprep.subr.bf16.mxu0 0
  %419 = vmatpush1.bf16.msra.mxu0 %v399
  %420 = vmatprep.subr.bf16.mxu0 0
  %421 = vmatpush1.bf16.msra.mxu0 %v400
  %422 = vmatprep.subr.bf16.mxu0 0
  %423 = vmatpush1.bf16.msra.mxu0 %v401
  %424 = vmatprep.subr.bf16.mxu0 0
  %425 = vmatpush1.bf16.msra.mxu0 %v402
  %426 = vmatprep.subr.bf16.mxu0 0
  %427 = vmatpush1.bf16.msra.mxu0 %v403
  %428 = vmatprep.subr.bf16.mxu0 0
  %429 = vmatpush1.bf16.msra.mxu0 0
  %430 = vmatprep.subr.bf16.mxu0 0
  %431 = vmatpush1.bf16.msra.mxu0 0
  %432 = vmatprep.subr.bf16.mxu0 0
  %433 = vmatpush1.bf16.msra.mxu0 0
  %434 = vmatprep.subr.bf16.mxu0 0
  %435 = vmatpush1.bf16.msra.mxu0 0
  %436 = vmatprep.subr.bf16.mxu0 0
  %437 = vmatpush1.bf16.msra.mxu0 0
  %438 = vmatprep.subr.bf16.mxu0 0
  %439 = vmatpush1.bf16.msra.mxu0 0
  %440 = vmatprep.subr.bf16.mxu0 0
  %441 = vmatpush1.bf16.msra.mxu0 0
  %442 = vmatprep.subr.bf16.mxu0 0
  %443 = vmatpush1.bf16.msra.mxu0 0
  %444 = vmatprep.mubr.bf16.mxu0 0
  %445 = vmatmul.mubr.bf16.gmra.mrb[0].mxu0 %v329
  %v446 = vpop.f32.mrb[0].mxu0
  %v447 = vadd.f32 0.0, %v446
  %v448 = vpop.f32.mrb[0].mxu0
  %v449 = vpop.f32.mrb[0].mxu0
  %v450 = vadd.f32 0.0, %v449
  %v451 = vpop.f32.mrb[0].mxu0
  %452 = vmatprep.mubr.bf16.mxu0 0
  %453 = vmatmul.mubr.bf16.gmra.mrb[0].mxu0 %v330
  %v454 = vpop.f32.mrb[0].mxu0
  %v455 = vadd.f32 0.0, %v454
  %v456 = vpop.f32.mrb[0].mxu0
  %v457 = vpop.f32.mrb[0].mxu0
  %v458 = vadd.f32 0.0, %v457
  %v459 = vpop.f32.mrb[0].mxu0
  %460 = vmatprep.mubr.bf16.mxu0 0
  %461 = vmatmul.mubr.bf16.gmra.mrb[0].mxu0 %v331
  %v462 = vpop.f32.mrb[0].mxu0
  %v463 = vadd.f32 0.0, %v462
  %v464 = vpop.f32.mrb[0].mxu0
  %v465 = vpop.f32.mrb[0].mxu0
  %v466 = vpop.f32.mrb[0].mxu0
  %467 = vdwg.mxu0
  %vm473 = vcmask 1046528
  %v474 = vrot.slane %v447, 1
  %v475 = vrot.slane %v450, 1
  %v476 = vsel %vm473, %v474, %v475
  %v477 = vrot.slane %v455, 1
  %v478 = vsel %vm473, %v475, %v477
  %v479 = vrot.slane %v458, 1
  %v480 = vsel %vm473, %v477, %v479
  %v481 = vrot.slane %v463, 1
  %v482 = vsel %vm473, %v479, %v481
  %v488 = vrot.slane %v447, 7
  %vm490 = vcmask 1040384
  %v491 = vsel %vm490, %v481, %v488
  %v508 = vunpack.c.l.b16 %v332
  %v509 = vunpack.c.l.b16 %v333
  %v510 = vunpack.c.l.b16 %v334
  %v511 = vunpack.c.l.b16 %v335
  %v512 = vunpack.c.l.b16 %v336
  %v513 = vunpack.c.l.b16 %v337
  %v514 = vunpack.c.l.b16 %v338
  %v515 = vunpack.c.l.b16 %v339
  %v516 = vunpack.c.l.b16 %v340
  %v517 = vunpack.c.l.b16 %v341
  %v518 = vunpack.c.l.b16 %v342
  %v519 = vunpack.c.l.b16 %v343
  %v520 = vunpack.c.l.b16 %v344
  %v521 = vunpack.c.l.b16 %v345
  %v522 = vunpack.c.l.b16 %v346
  %v523 = vunpack.c.l.b16 %v347
  %v524 = vpack.c.b16 %v509, %v508
  %v525 = vpack.c.b16 %v511, %v510
  %v526 = vpack.c.b16 %v513, %v512
  %v527 = vpack.c.b16 %v515, %v514
  %v528 = vpack.c.b16 %v517, %v516
  %v529 = vpack.c.b16 %v519, %v518
  %v530 = vpack.c.b16 %v521, %v520
  %v531 = vpack.c.b16 %v523, %v522
  %540 = vmatprep.subr.bf16.mxu0 0
  %541 = vmatpush1.bf16.msra.mxu0 %v524
  %542 = vmatprep.subr.bf16.mxu0 0
  %543 = vmatpush1.bf16.msra.mxu0 %v525
  %544 = vmatprep.subr.bf16.mxu0 0
  %545 = vmatpush1.bf16.msra.mxu0 %v526
  %546 = vmatprep.subr.bf16.mxu0 0
  %547 = vmatpush1.bf16.msra.mxu0 %v527
  %548 = vmatprep.subr.bf16.mxu0 0
  %549 = vmatpush1.bf16.msra.mxu0 %v528
  %550 = vmatprep.subr.bf16.mxu0 0
  %551 = vmatpush1.bf16.msra.mxu0 %v529
  %552 = vmatprep.subr.bf16.mxu0 0
  %553 = vmatpush1.bf16.msra.mxu0 %v530
  %554 = vmatprep.subr.bf16.mxu0 0
  %555 = vmatpush1.bf16.msra.mxu0 %v531
  %556 = vmatprep.subr.bf16.mxu0 0
  %557 = vmatpush1.bf16.msra.mxu0 0
  %558 = vmatprep.subr.bf16.mxu0 0
  %559 = vmatpush1.bf16.msra.mxu0 0
  %560 = vmatprep.subr.bf16.mxu0 0
  %561 = vmatpush1.bf16.msra.mxu0 0
  %562 = vmatprep.subr.bf16.mxu0 0
  %563 = vmatpush1.bf16.msra.mxu0 0
  %564 = vmatprep.subr.bf16.mxu0 0
  %565 = vmatpush1.bf16.msra.mxu0 0
  %566 = vmatprep.subr.bf16.mxu0 0
  %567 = vmatpush1.bf16.msra.mxu0 0
  %568 = vmatprep.subr.bf16.mxu0 0
  %569 = vmatpush1.bf16.msra.mxu0 0
  %570 = vmatprep.subr.bf16.mxu0 0
  %571 = vmatpush1.bf16.msra.mxu0 0
  %572 = vmatprep.mubr.bf16.mxu0 0
  %573 = vmatmul.mubr.bf16.gmra.mrb[0].mxu0 %v329
  %v574 = vpop.f32.mrb[0].mxu0
  %v575 = vadd.f32 %v476, %v574
  %v576 = vpop.f32.mrb[0].mxu0
  %v577 = vpop.f32.mrb[0].mxu0
  %v578 = vadd.f32 %v478, %v577
  %v579 = vpop.f32.mrb[0].mxu0
  %580 = vmatprep.mubr.bf16.mxu0 0
  %581 = vmatmul.mubr.bf16.gmra.mrb[0].mxu0 %v330
  %v582 = vpop.f32.mrb[0].mxu0
  %v583 = vadd.f32 %v480, %v582
  %v584 = vpop.f32.mrb[0].mxu0
  %v585 = vpop.f32.mrb[0].mxu0
  %v586 = vadd.f32 %v482, %v585
  %v587 = vpop.f32.mrb[0].mxu0
  %588 = vmatprep.mubr.bf16.mxu0 0
  %589 = vmatmul.mubr.bf16.gmra.mrb[0].mxu0 %v331
  %v590 = vpop.f32.mrb[0].mxu0
  %v591 = vadd.f32 %v491, %v590
  %v592 = vpop.f32.mrb[0].mxu0
  %v593 = vpop.f32.mrb[0].mxu0
  %v594 = vpop.f32.mrb[0].mxu0
  %595 = vdwg.mxu0
  %v596 = vlaneseq
  %v597 = vshrl.u32 %v596, 7
  %v598 = vsub.s32 3, %v597
  %v599 = vrot.slane %v18, %v598
  %v600 = vadd.f32 %v575, %v599
  %v601 = vadd.f32 %v578, %v599
  %v602 = vadd.f32 %v583, %v599
  %v603 = vadd.f32 %v586, %v599
  %v604 = vadd.f32 %v591, %v599
  %v605 = vlaneseq
  %v606 = vshrl.u32 %v605, 7
  %v607 = vsub.s32 4, %v606
  %v608 = vrot.slane %v18, %v607
  %v609 = vadd.f32 %v173, %v608
  %v610 = vadd.f32 %v177, %v608
  %v611 = vadd.f32 %v183, %v608
  %v612 = vadd.f32 %v187, %v608
  %v613 = vadd.f32 %v193, %v608
  %v614 = vadd.f32 %v600, %v609
  %v615 = vadd.f32 %v601, %v610
  %v616 = vadd.f32 %v602, %v611
  %v617 = vadd.f32 %v603, %v612
  %v618 = vadd.f32 %v604, %v613
  %619 = vst [vmem:[%s4] sm:$0xff] %v614
  %620 = vst [vmem:[%s4 + $0x8] sm:$0xff] %v615
  %621 = vst [vmem:[%s4 + $0x10] sm:$0xff] %v616
  %622 = vst [vmem:[%s4 + $0x18] sm:$0xff] %v617
  %623 = vst [vmem:[%s4 + $0x20] sm:$0x3] %v618
  // Predicated region
  $region18: #{_forward.1} parent=0 // pred_check
    _
  $region19: #{_forward.1} parent=0 // pred_check_branch
    %625 = sbr.rel (0) target = $region21
  $region20: #{_forward.1} parent=0 // pred_region
    _
  $region21: #{_forward.1} parent=0 // pred_fallthru
    _
  // Predicated region
  $region22: #{_forward.1} parent=0 // pred_check
    _
  $region23: #{_forward.1} parent=0 // pred_check_branch
    %627 = sbr.rel (0) target = $region25
  $region24: #{_forward.1} parent=0 // pred_region
    _
  $region25: #{_forward.1} parent=0 // pred_fallthru
    _

</llo_original>
